<compile_context>
chip_gen: v5e
topology: v5e:2x2
jax: 0.10.0
libtpu: 0.0.40
codegen_flags: <defaults>
</compile_context>

<pallas_src>
import functools
import math

import jax
import jax.numpy as jnp
from jax import lax
from jax.experimental import pallas as pl
from jax.experimental.pallas import tpu as pltpu

LANE = 128
SUBLANE = 8
NEG_INF = -1e30   # plain Python float -> jaxpr literal, never a captured array constant

_VMEM = pl.BlockSpec(memory_space=pltpu.MemorySpace.VMEM)
_SMEM = pl.BlockSpec(memory_space=pltpu.MemorySpace.SMEM)


def _round_up(x, m):
    return ((x + m - 1) // m) * m


# --------------------------------------------------------------------------------------
# In-kernel helpers (operate on loaded values; scalar constants are Python floats only)
# --------------------------------------------------------------------------------------
def _softmax(logits):
    m = jnp.max(logits, axis=-1, keepdims=True)
    e = jnp.exp(logits - m)
    return e / jnp.sum(e, axis=-1, keepdims=True)


def _embed_nodes(x, wn, b_n2l):
    """x @ [w_n2l_type | w_n2l_action] + bias -> pre-relu h and node_embed, both (N, 2D)."""
    h = jnp.dot(x, wn, preferred_element_type=jnp.float32) + b_n2l
    return h, jnp.maximum(h, 0.0)


def _target_graph_selector(t, n):
    """(2, N) selector: row 0 = one-hot(target_node), row 1 = 1/N (mean).
    Keeps the target gather and the cross-node mean on the MXU instead of the XLU."""
    rows = lax.broadcasted_iota(jnp.int32, (2, n), 0)
    cols = lax.broadcasted_iota(jnp.int32, (2, n), 1)
    onehot = (cols == t).astype(jnp.float32)
    return jnp.where(rows == 0, onehot, 1.0 / float(n))


def _type_head(tg, ne, wt_ref, bt_ref, d):
    """TypeNet head -> (1, LANE) softmax; lanes >= region_length are exactly 0.

    tg: (2, 2D) = [[target | .], [mean(ne) | .]];  ne: (N, 2D).
    wt_ref blocks (all (2D, LANE), zero-padded so no lane slicing is needed):
      0: query_proj target half   1: query_proj graph half
      2: key|value proj (K in lanes :D, V in lanes D:)   3: output_layer (rows D: only)
    """
    q2 = (jnp.dot(tg[0:1, :], wt_ref[0], preferred_element_type=jnp.float32)
          + jnp.dot(tg[1:2, :], wt_ref[1], preferred_element_type=jnp.float32)
          + bt_ref[1:2, :])                                                 # (1, 2D), lanes D: == 0
    kv = jnp.dot(ne, wt_ref[2], preferred_element_type=jnp.float32) + bt_ref[2:3, :]   # (N, 2D)
    scores = lax.dot_general(q2, kv, (((1,), (1,)), ((), ())),
                             preferred_element_type=jnp.float32)            # (1, N) = q @ K^T
    scores = scores * (1.0 / math.sqrt(float(d)))
    attn = _softmax(scores)
    ctx2 = jnp.dot(attn, kv, preferred_element_type=jnp.float32)            # (1, 2D) = [aK | aV]
    logits = jnp.dot(ctx2, wt_ref[3], preferred_element_type=jnp.float32) + bt_ref[3:4, :]
    return _softmax(logits)   # padded lanes carry bias -1e30 -> probability exactly 0


def _action_head(tg, gpre, ne, wa_ref, ba_ref, rs, region_len, r_rows):
    """ActionNet head -> (1, r_rows) softmax over the action region (r_rows = 8-row pad)."""
    n = ne.shape[0]
    rr = lax.broadcasted_iota(jnp.int32, (r_rows, n), 0)
    cc = lax.broadcasted_iota(jnp.int32, (r_rows, n), 1)
    sel = jnp.logical_and(cc == rr + rs, rr < region_len).astype(jnp.float32)
    region = jnp.dot(sel, ne, preferred_element_type=jnp.float32)           # (r_rows, 2D)
    h1 = (jnp.dot(region, wa_ref[0], preferred_element_type=jnp.float32)
          + jnp.dot(gpre, wa_ref[1], preferred_element_type=jnp.float32)
          + ba_ref[1:2, :])
    h1 = jnp.maximum(h1, 0.0)                                               # (r_rows, LANE)
    raw = jnp.dot(h1, wa_ref[2], preferred_element_type=jnp.float32) + ba_ref[2:3, :]
    # raw lanes :D are zero, so contracting the full target row picks its action half only
    scores = lax.dot_general(tg[0:1, :], raw, (((1,), (1,)), ((), ())),
                             preferred_element_type=jnp.float32)            # (1, r_rows)
    lane = lax.broadcasted_iota(jnp.int32, (1, r_rows), 1)
    scores = jnp.where(lane < region_len, scores, NEG_INF)
    return _softmax(scores)


# --------------------------------------------------------------------------------------
# Kernels
# --------------------------------------------------------------------------------------
def _type_net_kernel(idx_ref, x_ref, wn_ref, wt_ref, bt_ref, out_ref):
    n = x_ref.shape[0]
    d = wn_ref.shape[1] // 2
    t = idx_ref[0]
    _, ne = _embed_nodes(x_ref[...], wn_ref[...], bt_ref[0:1, :])
    sel = _target_graph_selector(t, n)
    tg = jnp.dot(sel, ne, preferred_element_type=jnp.float32)               # (2, 2D)
    out_ref[...] = _type_head(tg, ne, wt_ref, bt_ref, d)


def _action_net_kernel(region_len, r_rows, idx_ref, x_ref, wn_ref, wa_ref, ba_ref, out_ref):
    n = x_ref.shape[0]
    t = idx_ref[0]
    rs = idx_ref[1]
    h, ne = _embed_nodes(x_ref[...], wn_ref[...], ba_ref[0:1, :])
    sel = _target_graph_selector(t, n)
    tg = jnp.dot(sel, ne, preferred_element_type=jnp.float32)               # row 0 = target
    gpre = jnp.dot(sel[1:2, :], h, preferred_element_type=jnp.float32)      # pre-ReLU mean
    probs = _action_head(tg, gpre, ne, wa_ref, ba_ref, rs, region_len, r_rows)
    out_ref[...] = jnp.zeros_like(out_ref)          # lane-dense (1, 128) output
    out_ref[:, :r_rows] = probs


def _fused_step_kernel(region_len, r_rows, idx_ref, x_ref, wn_ref,
                       wt_ref, bt_ref, wa_ref, ba_ref, type_out_ref, act_out_ref):
    """TypeNet + ActionNet of one step: one launch, one x DMA, one shared n2l matmul
    and one shared target/mean selector matmul."""
    n = x_ref.shape[0]
    d = wn_ref.shape[1] // 2
    t = idx_ref[0]
    rs = idx_ref[1]
    h, ne = _embed_nodes(x_ref[...], wn_ref[...], bt_ref[0:1, :])
    sel = _target_graph_selector(t, n)
    tg = jnp.dot(sel, ne, preferred_element_type=jnp.float32)
    gpre = jnp.dot(sel[1:2, :], h, preferred_element_type=jnp.float32)
    type_out_ref[...] = _type_head(tg, ne, wt_ref, bt_ref, d)
    probs = _action_head(tg, gpre, ne, wa_ref, ba_ref, rs, region_len, r_rows)
    act_out_ref[...] = jnp.zeros_like(act_out_ref)
    act_out_ref[:, :r_rows] = probs
    # TODO(synk): on v7x the two heads could be sharded across the two TensorCores with
    #             a size-2 "parallel" grid axis; kept single-core here.


# --------------------------------------------------------------------------------------
# Wrappers (jitted; index vector built on device)
# --------------------------------------------------------------------------------------
@functools.partial(jax.jit, static_argnames=("out_len",))
def type_net_forward(params, x, target_node, *, out_len):
    idx = jnp.stack([jnp.asarray(target_node, jnp.int32), jnp.asarray(0, jnp.int32)])
    out = pl.pallas_call(
        _type_net_kernel,
        out_shape=jax.ShapeDtypeStruct((1, LANE), jnp.float32),
        in_specs=[_SMEM, _VMEM, _VMEM, _VMEM, _VMEM],
        out_specs=_VMEM,
    )(idx, x, params["w_n2l"], params["Wt"], params["Bt"])
    return out[0, :out_len]


@functools.partial(jax.jit, static_argnames=("region_len",))
def action_net_forward(params, x, target_node, region_start, *, region_len):
    assert 1 <= region_len <= LANE
    r_rows = _round_up(region_len, SUBLANE)
    idx = jnp.stack([jnp.asarray(target_node, jnp.int32),
                     jnp.asarray(region_start, jnp.int32)])
    out = pl.pallas_call(
        functools.partial(_action_net_kernel, region_len, r_rows),
        out_shape=jax.ShapeDtypeStruct((1, LANE), jnp.float32),
        in_specs=[_SMEM, _VMEM, _VMEM, _VMEM, _VMEM],
        out_specs=_VMEM,
    )(idx, x, params["w_n2l"], params["Wa"], params["Ba"])
    return out[0, :region_len]


@functools.partial(jax.jit, static_argnames=("out_len", "region_len"))
def fused_step_forward(params, x, target_node, region_start, *, out_len, region_len):
    assert 1 <= region_len <= LANE
    r_rows = _round_up(region_len, SUBLANE)
    idx = jnp.stack([jnp.asarray(target_node, jnp.int32),
                     jnp.asarray(region_start, jnp.int32)])
    type_out, act_out = pl.pallas_call(
        functools.partial(_fused_step_kernel, region_len, r_rows),
        out_shape=(jax.ShapeDtypeStruct((1, LANE), jnp.float32),
                   jax.ShapeDtypeStruct((1, LANE), jnp.float32)),
        in_specs=[_SMEM, _VMEM, _VMEM, _VMEM, _VMEM, _VMEM, _VMEM],
        out_specs=(_VMEM, _VMEM),
    )(idx, x, params["w_n2l"], params["Wt"], params["Bt"], params["Wa"], params["Ba"])
    return type_out[0, :out_len], act_out[0, :region_len]


# --------------------------------------------------------------------------------------
# Parameter init + MXU/DMA-friendly packing (weights pre-transposed to (in, out))
# --------------------------------------------------------------------------------------
def _glorot(key, shape):
    fan_in, fan_out = shape
    limit = (6.0 / (fan_in + fan_out)) ** 0.5
    return jax.random.uniform(key, shape, jnp.float32, -limit, limit)


def init_step_params(key, feat_dim, embed_dim, mlp_hidden, region_length):
    """One step's TypeNet + ActionNet, packed into zero-padded 128-lane blocks."""
    assert 2 * embed_dim == LANE, "packing assumes embed_dim == 64 (module default)"
    assert mlp_hidden <= LANE and region_length <= LANE
    d, hd, out = embed_dim, mlp_hidden, region_length
    ks = jax.random.split(key, 10)

    # TypeNet raw params (nn.Linear biases start at zero; bare Parameters are glorot)
    wn_t = _glorot(ks[0], (feat_dim, d))
    bn_t = _glorot(ks[1], (1, d))                  # bias_n2l Parameter
    wq = _glorot(ks[2], (2 * d, d))                # query_proj  (in, out)
    wk = _glorot(ks[3], (d, d))                    # key_proj
    wv = _glorot(ks[4], (d, d))                    # value_proj
    wo_t = _glorot(ks[5], (d, out))                # output_layer
    # ActionNet raw params
    wn_a = _glorot(ks[6], (feat_dim, d))
    bn_a = _glorot(ks[7], (1, d))
    w1 = _glorot(ks[8], (2 * d, hd))               # linear_1
    wo_a = _glorot(ks[9], (hd, d))                 # linear_out

    # fused node->latent projection: both heads out of one (feat, 2D) matmul
    w_n2l = jnp.concatenate([wn_t, wn_a], axis=1)                          # (FEAT, 2D)
    b_n2l = jnp.concatenate([bn_t, bn_a], axis=1)[0]                        # (2D,)

    z = jnp.zeros((LANE, LANE), jnp.float32)
    # TypeNet weight pack: rows = 2D lanes of ne/ctx; action-half / K-half rows stay zero
    wt = jnp.stack([
        z.at[:d, :d].set(wq[:d]),                  # 0: query from target   (type half)
        z.at[:d, :d].set(wq[d:]),                  # 1: query from graph    (type half)
        z.at[:d, :d].set(wk).at[:d, d:].set(wv),   # 2: K | V
        z.at[d:, :out].set(wo_t),                  # 3: output_layer (reads the V half)
    ])
    # ActionNet weight pack
    wa = jnp.stack([
        z.at[d:, :hd].set(w1[:d]),                 # 0: linear_1 node half  (action lanes)
        z.at[d:, :hd].set(w1[d:]),                 # 1: linear_1 graph half (action lanes)
        z.at[:hd, d:].set(wo_a),                   # 2: linear_out -> output lanes D:
    ])

    # bias packs (one (8, 128) VMEM operand per head); nn.Linear biases are zero at init
    bq = jnp.zeros((d,), jnp.float32)
    bk = jnp.zeros((d,), jnp.float32)
    bv = jnp.zeros((d,), jnp.float32)
    bo_t = jnp.zeros((out,), jnp.float32)
    b1 = jnp.zeros((hd,), jnp.float32)
    bo_a = jnp.zeros((d,), jnp.float32)
    bt = (jnp.zeros((SUBLANE, LANE), jnp.float32)
          .at[0, :].set(b_n2l)
          .at[1, :d].set(bq)
          .at[2, :d].set(bk).at[2, d:].set(bv)
          .at[3, :].set(NEG_INF).at[3, :out].set(bo_t))   # -1e30 pad -> softmax prob 0
    ba = (jnp.zeros((SUBLANE, LANE), jnp.float32)
          .at[0, :].set(b_n2l)
          .at[1, :hd].set(b1)
          .at[2, d:].set(bo_a))

    return {"w_n2l": w_n2l, "Wt": wt, "Bt": bt, "Wa": wa, "Ba": ba}


class NStepQNetNodePallas:
    """num_steps * [TypeNet, ActionNet]; dispatch by time_t parity like NStepQNetNode."""

    def __init__(self, key, num_steps, feat_dim, embed_dim, mlp_hidden, region_length):
        self.num_steps = num_steps * 2
        self.region_length = region_length
        keys = jax.random.split(key, num_steps)
        self.step_params = [
            init_step_params(k, feat_dim, embed_dim, mlp_hidden, region_length)
            for k in keys
        ]

    def forward(self, time_t, node_features, target_node, selected_type=None,
                region_start=0, region_len=8):
        assert 0 <= time_t < self.num_steps
        params = self.step_params[time_t // 2]
        if selected_type is None:                 # even slots: TypeNet
            assert time_t % 2 == 0
            return type_net_forward(params, node_features, target_node,
                                    out_len=self.region_length)
        assert time_t % 2 == 1                    # odd slots: ActionNet
        # TODO(synk): StaticGraph.node_mapping / list_action_space lookup that maps
        #             selected_type -> (region_start, region_len) is host-side graph
        #             bookkeeping with no Pallas equivalent; the region is passed in.
        return action_net_forward(params, node_features, target_node, region_start,
                                  region_len=region_len)

    def forward_step(self, step, node_features, target_node, region_start=0, region_len=8):
        """Fused TypeNet+ActionNet of one step (single pallas_call, shared x DMA / n2l)."""
        return fused_step_forward(self.step_params[step], node_features, target_node,
                                  region_start, out_len=self.region_length,
                                  region_len=region_len)


# --------------------------------------------------------------------------------------
if __name__ == "__main__":
    N = 64            # total nodes
    FEAT = 32         # node feature dim
    D = 64            # embed_dim (module default)
    H = 64            # mlp_hidden (module default)
    RL = 8            # region_length (TypeNet output size)
    R = 8             # ActionNet region size
    NUM_STEPS = 2

    key = jax.random.PRNGKey(0)
    k_feat, k_net = jax.random.split(key)
    node_features = jax.random.normal(k_feat, (N, FEAT), jnp.float32)

    net = NStepQNetNodePallas(k_net, NUM_STEPS, FEAT, D, H, RL)
    target_node = 3

    # time_t = 0 -> TypeNet head (selected_type is None)
    type_probs = jax.block_until_ready(net.forward(0, node_features, target_node))

    # time_t = 1 -> ActionNet head (selected_type given; region = rows [4, 4+R))
    act_probs = jax.block_until_ready(
        net.forward(1, node_features, target_node,
                    selected_type=2, region_start=4, region_len=R))

    # fused step (both heads, one pallas_call) must match the individual calls
    f_type, f_act = net.forward_step(0, node_features, target_node,
                                     region_start=4, region_len=R)
    f_type, f_act = jax.block_until_ready((f_type, f_act))

    assert type_probs.shape == (RL,) and act_probs.shape == (R,)
    assert bool(jnp.isfinite(type_probs).all()) and bool(jnp.isfinite(act_probs).all())
    assert abs(float(jnp.sum(type_probs)) - 1.0) < 1e-3
    assert abs(float(jnp.sum(act_probs)) - 1.0) < 1e-3
    assert f_type.shape == (RL,) and f_act.shape == (R,)
    assert bool(jnp.allclose(f_type, type_probs, atol=1e-5))
    assert bool(jnp.allclose(f_act, act_probs, atol=1e-5))

    print("KERNEL_OK")
</pallas_src>

<mosaic_0001>
module attributes {stable_mosaic.version = 11 : i64} {
  func.func @_type_net_kernel(%arg0: memref<2xi32, #tpu.memory_space<smem>>, %arg1: memref<64x32xf32, #tpu.memory_space<vmem>>, %arg2: memref<32x128xf32, #tpu.memory_space<vmem>>, %arg3: memref<4x128x128xf32, #tpu.memory_space<vmem>>, %arg4: memref<8x128xf32, #tpu.memory_space<vmem>>, %arg5: memref<1x128xf32, #tpu.memory_space<vmem>>) attributes {dimension_semantics = [], scalar_prefetch = 0 : i64, scratch_operands = 0 : i64, tpu.core_type = #tpu.core_type<tc>} {
    %c0 = arith.constant 0 : index
    %0 = memref.load %arg0[%c0] : memref<2xi32, #tpu.memory_space<smem>>
    %c0_0 = arith.constant 0 : index
    %c0_1 = arith.constant 0 : index
    %1 = vector.load %arg1[%c0_0, %c0_1] : memref<64x32xf32, #tpu.memory_space<vmem>>, vector<64x32xf32>
    %c0_2 = arith.constant 0 : index
    %c0_3 = arith.constant 0 : index
    %2 = vector.load %arg2[%c0_2, %c0_3] : memref<32x128xf32, #tpu.memory_space<vmem>>, vector<32x128xf32>
    %c0_4 = arith.constant 0 : index
    %c0_5 = arith.constant 0 : index
    %3 = vector.load %arg4[%c0_4, %c0_5] : memref<8x128xf32, #tpu.memory_space<vmem>>, vector<1x128xf32>
    %cst = arith.constant dense<0.000000e+00> : vector<64x128xf32>
    %4 = tpu.matmul %1, %2, %cst {dimension_numbers = #tpu.dot_dimension_numbers<[1], [0], [0], [1], [0, 0, 1, 1], [], []>} : vector<64x32xf32>, vector<32x128xf32>, vector<64x128xf32> -> vector<64x128xf32>
    %5 = vector.broadcast %3 : vector<1x128xf32> to vector<64x128xf32>
    %6 = arith.addf %4, %5 : vector<64x128xf32>
    %cst_6 = arith.constant 0.000000e+00 : f32
    %7 = vector.broadcast %cst_6 : f32 to vector<64x128xf32>
    %8 = arith.maximumf %6, %7 : vector<64x128xf32>
    %9 = tpu.iota {dimensions = array<i32: 0>} : vector<2x64xi32>
    %10 = tpu.iota {dimensions = array<i32: 1>} : vector<2x64xi32>
    %11 = vector.broadcast %0 : i32 to vector<2x64xi32>
    %12 = arith.cmpi eq, %10, %11 : vector<2x64xi32>
    %13 = arith.extui %12 : vector<2x64xi1> to vector<2x64xi32>
    %14 = arith.sitofp %13 : vector<2x64xi32> to vector<2x64xf32>
    %c0_i32 = arith.constant 0 : i32
    %15 = vector.broadcast %c0_i32 : i32 to vector<2x64xi32>
    %16 = arith.cmpi eq, %9, %15 : vector<2x64xi32>
    %cst_7 = arith.constant 1.562500e-02 : f32
    %17 = vector.broadcast %cst_7 : f32 to vector<2x64xf32>
    %18 = arith.select %16, %14, %17 : vector<2x64xi1>, vector<2x64xf32>
    %cst_8 = arith.constant dense<0.000000e+00> : vector<2x128xf32>
    %19 = tpu.matmul %18, %8, %cst_8 {dimension_numbers = #tpu.dot_dimension_numbers<[1], [0], [0], [1], [0, 0, 1, 1], [], []>} : vector<2x64xf32>, vector<64x128xf32>, vector<2x128xf32> -> vector<2x128xf32>
    %20 = vector.extract_strided_slice %19 {offsets = [0, 0], sizes = [1, 128], strides = [1, 1]} : vector<2x128xf32> to vector<1x128xf32>
    %c0_9 = arith.constant 0 : index
    %c0_10 = arith.constant 0 : index
    %c0_11 = arith.constant 0 : index
    %21 = vector.load %arg3[%c0_9, %c0_10, %c0_11] : memref<4x128x128xf32, #tpu.memory_space<vmem>>, vector<1x128x128xf32>
    %22 = vector.shape_cast %21 : vector<1x128x128xf32> to vector<128x128xf32>
    %cst_12 = arith.constant dense<0.000000e+00> : vector<1x128xf32>
    %23 = tpu.matmul %20, %22, %cst_12 {dimension_numbers = #tpu.dot_dimension_numbers<[1], [0], [0], [1], [0, 0, 1, 1], [], []>} : vector<1x128xf32>, vector<128x128xf32>, vector<1x128xf32> -> vector<1x128xf32>
    %24 = vector.extract_strided_slice %19 {offsets = [1, 0], sizes = [1, 128], strides = [1, 1]} : vector<2x128xf32> to vector<1x128xf32>
    %c1 = arith.constant 1 : index
    %c0_13 = arith.constant 0 : index
    %c0_14 = arith.constant 0 : index
    %25 = vector.load %arg3[%c1, %c0_13, %c0_14] : memref<4x128x128xf32, #tpu.memory_space<vmem>>, vector<1x128x128xf32>
    %26 = vector.shape_cast %25 : vector<1x128x128xf32> to vector<128x128xf32>
    %cst_15 = arith.constant dense<0.000000e+00> : vector<1x128xf32>
    %27 = tpu.matmul %24, %26, %cst_15 {dimension_numbers = #tpu.dot_dimension_numbers<[1], [0], [0], [1], [0, 0, 1, 1], [], []>} : vector<1x128xf32>, vector<128x128xf32>, vector<1x128xf32> -> vector<1x128xf32>
    %28 = arith.addf %23, %27 : vector<1x128xf32>
    %c1_16 = arith.constant 1 : index
    %c0_17 = arith.constant 0 : index
    %29 = vector.load %arg4[%c1_16, %c0_17] : memref<8x128xf32, #tpu.memory_space<vmem>>, vector<1x128xf32>
    %30 = arith.addf %28, %29 : vector<1x128xf32>
    %c2 = arith.constant 2 : index
    %c0_18 = arith.constant 0 : index
    %c0_19 = arith.constant 0 : index
    %31 = vector.load %arg3[%c2, %c0_18, %c0_19] : memref<4x128x128xf32, #tpu.memory_space<vmem>>, vector<1x128x128xf32>
    %32 = vector.shape_cast %31 : vector<1x128x128xf32> to vector<128x128xf32>
    %cst_20 = arith.constant dense<0.000000e+00> : vector<64x128xf32>
    %33 = tpu.matmul %8, %32, %cst_20 {dimension_numbers = #tpu.dot_dimension_numbers<[1], [0], [0], [1], [0, 0, 1, 1], [], []>} : vector<64x128xf32>, vector<128x128xf32>, vector<64x128xf32> -> vector<64x128xf32>
    %c2_21 = arith.constant 2 : index
    %c0_22 = arith.constant 0 : index
    %34 = vector.load %arg4[%c2_21, %c0_22] : memref<8x128xf32, #tpu.memory_space<vmem>>, vector<1x128xf32>
    %35 = vector.broadcast %34 : vector<1x128xf32> to vector<64x128xf32>
    %36 = arith.addf %33, %35 : vector<64x128xf32>
    %cst_23 = arith.constant dense<0.000000e+00> : vector<1x64xf32>
    %37 = tpu.matmul %30, %36, %cst_23 {dimension_numbers = #tpu.dot_dimension_numbers<[1], [1], [0], [0], [0, 0, 1, 0], [], []>} : vector<1x128xf32>, vector<64x128xf32>, vector<1x64xf32> -> vector<1x64xf32>
    %cst_24 = arith.constant 1.250000e-01 : f32
    %38 = vector.broadcast %cst_24 : f32 to vector<1x64xf32>
    %39 = arith.mulf %37, %38 : vector<1x64xf32>
    %cst_25 = arith.constant dense<0xFF800000> : vector<1xf32>
    %40 = vector.multi_reduction <maximumf>, %39, %cst_25 [1] : vector<1x64xf32> to vector<1xf32>
    %41 = vector.shape_cast %40 : vector<1xf32> to vector<1x1xf32>
    %42 = vector.broadcast %41 : vector<1x1xf32> to vector<1x64xf32>
    %43 = arith.subf %39, %42 : vector<1x64xf32>
    %44 = math.exp %43 : vector<1x64xf32>
    %cst_26 = arith.constant dense<0.000000e+00> : vector<1xf32>
    %45 = vector.multi_reduction <add>, %44, %cst_26 [1] : vector<1x64xf32> to vector<1xf32>
    %46 = vector.shape_cast %45 : vector<1xf32> to vector<1x1xf32>
    %47 = vector.broadcast %46 : vector<1x1xf32> to vector<1x64xf32>
    %48 = arith.divf %44, %47 : vector<1x64xf32>
    %cst_27 = arith.constant dense<0.000000e+00> : vector<1x128xf32>
    %49 = tpu.matmul %48, %36, %cst_27 {dimension_numbers = #tpu.dot_dimension_numbers<[1], [0], [0], [1], [0, 0, 1, 1], [], []>} : vector<1x64xf32>, vector<64x128xf32>, vector<1x128xf32> -> vector<1x128xf32>
    %c3 = arith.constant 3 : index
    %c0_28 = arith.constant 0 : index
    %c0_29 = arith.constant 0 : index
    %50 = vector.load %arg3[%c3, %c0_28, %c0_29] : memref<4x128x128xf32, #tpu.memory_space<vmem>>, vector<1x128x128xf32>
    %51 = vector.shape_cast %50 : vector<1x128x128xf32> to vector<128x128xf32>
    %cst_30 = arith.constant dense<0.000000e+00> : vector<1x128xf32>
    %52 = tpu.matmul %49, %51, %cst_30 {dimension_numbers = #tpu.dot_dimension_numbers<[1], [0], [0], [1], [0, 0, 1, 1], [], []>} : vector<1x128xf32>, vector<128x128xf32>, vector<1x128xf32> -> vector<1x128xf32>
    %c3_31 = arith.constant 3 : index
    %c0_32 = arith.constant 0 : index
    %53 = vector.load %arg4[%c3_31, %c0_32] : memref<8x128xf32, #tpu.memory_space<vmem>>, vector<1x128xf32>
    %54 = arith.addf %52, %53 : vector<1x128xf32>
    %cst_33 = arith.constant dense<0xFF800000> : vector<1xf32>
    %55 = vector.multi_reduction <maximumf>, %54, %cst_33 [1] : vector<1x128xf32> to vector<1xf32>
    %56 = vector.shape_cast %55 : vector<1xf32> to vector<1x1xf32>
    %57 = vector.broadcast %56 : vector<1x1xf32> to vector<1x128xf32>
    %58 = arith.subf %54, %57 : vector<1x128xf32>
    %59 = math.exp %58 : vector<1x128xf32>
    %cst_34 = arith.constant dense<0.000000e+00> : vector<1xf32>
    %60 = vector.multi_reduction <add>, %59, %cst_34 [1] : vector<1x128xf32> to vector<1xf32>
    %61 = vector.shape_cast %60 : vector<1xf32> to vector<1x1xf32>
    %62 = vector.broadcast %61 : vector<1x1xf32> to vector<1x128xf32>
    %63 = arith.divf %59, %62 : vector<1x128xf32>
    %c0_35 = arith.constant 0 : index
    %c0_36 = arith.constant 0 : index
    %64 = vector.load %arg5[%c0_35, %c0_36] : memref<1x128xf32, #tpu.memory_space<vmem>>, vector<1x128xf32>
    tpu.vector_store %arg5[%c0_35, %c0_36], %63 {strides = array<i32>} : memref<1x128xf32, #tpu.memory_space<vmem>>, vector<1x128xf32>,
    return
  }
}

</mosaic_0001>

<llo_original>
// kernel: type_net_forward.1
$region0: #{type_net_forward.1}
  #allocation0 [shape = 'u32[]', space=smem, size = 0x4, offset = 0x4, fixed_abs, tag = 'smem constant byte address 0x4 - core index']
  #allocation1 [shape = 'u32[72,128]{1,0:T(1,128)}', space=vmem, size = 0x9000, scoped, tag = 'internal scratch']
  %s0 = inlined_call_operand.vmem [shape: s32[2], index: 0, kind: input, shape index: {}]
  %s1 = inlined_call_operand.vmem [shape: f32[64,32], index: 1, kind: input, shape index: {}]
  %s2 = inlined_call_operand.vmem [shape: f32[32,128], index: 2, kind: input, shape index: {}]
  %s3 = inlined_call_operand.hbm [shape: f32[4,128,128], index: 3, kind: input, shape index: {}]
  %s4 = inlined_call_operand.vmem [shape: f32[8,128], index: 4, kind: input, shape index: {}]
  %s5 = inlined_call_operand.vmem [shape: f32[1,128], index: 5, kind: output, shape index: {}]
  %s6 = sld [smem:[#allocation0]]
  $region38: #{type_net_forward.1} parent=0
    _
  %s8 = ssub.s32 1, %s6
  %s9 = scalar_select 0, %s8, %s6
  $region1: #{type_net_forward.1} parent=0
    #allocation2 [shape = 'u8[512]{0}', space=smem, size = 0x200, scoped, tag = 'input window, operand 0, single buffered']
    #allocation3 [shape = 's32[1]{0}', space=sflag, size = 0x4, scoped, tag = 'scoped memory for type_net_forward.1']
    #allocation4 [shape = 's32[1]{0}', space=sflag, size = 0x4, scoped, tag = 'scoped memory for type_net_forward.1']
    #allocation5 [shape = 'u8[262144]{0}', space=vmem, size = 0x40000, scoped, tag = 'input window, operand 3, single buffered']
    %10 = vsyncpa [#allocation4], 0
    %11 = vsyncpa [#allocation3], 0
    // Predicated region
    $region2: #{type_net_forward.1} parent=1 // pred_check
      _
    $region3: #{type_net_forward.1} parent=1 // pred_check_branch
      %13 = sbr.rel (0) target = $region5
    $region4: #{type_net_forward.1} parent=1 // pred_region
      %15 = vsyncadd [#allocation4], 0
      %s17 = sshll.u32 %s0, 4
      %s18 = int_to_ptr.vmem [resolvable:$true] %s17
      %20 = dma.vmem_to_smem %s18, 16, [#allocation2], [#allocation4]
    $region5: #{type_net_forward.1} parent=1 // pred_fallthru
      _
    // Predicated region
    $region6: #{type_net_forward.1} parent=1 // pred_check
      _
    $region7: #{type_net_forward.1} parent=1 // pred_check_branch
      %22 = sbr.rel (0) target = $region9
    $region8: #{type_net_forward.1} parent=1 // pred_region
      _
    $region9: #{type_net_forward.1} parent=1 // pred_fallthru
      _
    // Predicated region
    $region10: #{type_net_forward.1} parent=1 // pred_check
      _
    $region11: #{type_net_forward.1} parent=1 // pred_check_branch
      %24 = sbr.rel (0) target = $region13
    $region12: #{type_net_forward.1} parent=1 // pred_region
      _
    $region13: #{type_net_forward.1} parent=1 // pred_fallthru
      _
    // Predicated region
    $region14: #{type_net_forward.1} parent=1 // pred_check
      _
    $region15: #{type_net_forward.1} parent=1 // pred_check_branch
      %26 = sbr.rel (0) target = $region17
    $region16: #{type_net_forward.1} parent=1 // pred_region
      %28 = vsyncadd [#allocation3], 0
      %s29 = sshll.u32 %s3, 4
      %s30 = int_to_ptr.hbm [resolvable:$true] %s29
      %s31 = sshll.u32 [#allocation5], 4
      %s32 = int_to_ptr.vmem [resolvable:$true] %s31
      %37 = dma.hbm_to_vmem [thread:$0]  %s30, 8192, %s32, [#allocation3], 128, 128, 8
    $region17: #{type_net_forward.1} parent=1 // pred_fallthru
      _
    // Predicated region
    $region18: #{type_net_forward.1} parent=1 // pred_check
      _
    $region19: #{type_net_forward.1} parent=1 // pred_check_branch
      %39 = sbr.rel (0) target = $region21
    $region20: #{type_net_forward.1} parent=1 // pred_region
      _
    $region21: #{type_net_forward.1} parent=1 // pred_fallthru
      _
    // Predicated region
    $region22: #{type_net_forward.1} parent=1 // pred_check
      _
    $region23: #{type_net_forward.1} parent=1 // pred_check_branch
      %41 = sbr.rel (0) target = $region25
    $region24: #{type_net_forward.1} parent=1 // pred_region
      %43 = dma.done [#allocation4], 16
    $region25: #{type_net_forward.1} parent=1 // pred_fallthru
      _
    // Predicated region
    $region26: #{type_net_forward.1} parent=1 // pred_check
      _
    $region27: #{type_net_forward.1} parent=1 // pred_check_branch
      %45 = sbr.rel (0) target = $region29
    $region28: #{type_net_forward.1} parent=1 // pred_region
      %47 = dma.done [#allocation3], 8192
    $region29: #{type_net_forward.1} parent=1 // pred_fallthru
      _
    %48 = sfence
    %s49 = sld [smem:[#allocation2]]
    %v50 = vld [vmem:[%s1] sm:$0xff]
    %v51 = vld [vmem:[%s1 + $0x8] sm:$0xff]
    %v52 = vld [vmem:[%s1 + $0x10] sm:$0xff]
    %v53 = vld [vmem:[%s1 + $0x18] sm:$0xff]
    %v54 = vld [vmem:[%s1 + $0x20] sm:$0xff]
    %v55 = vld [vmem:[%s1 + $0x28] sm:$0xff]
    %v56 = vld [vmem:[%s1 + $0x30] sm:$0xff]
    %v57 = vld [vmem:[%s1 + $0x38] sm:$0xff]
    %v58 = vld [vmem:[%s2] sm:$0xff]
    %v59 = vld [vmem:[%s2 + $0x8] sm:$0xff]
    %v60 = vld [vmem:[%s2 + $0x10] sm:$0xff]
    %v61 = vld [vmem:[%s2 + $0x18] sm:$0xff]
    %v62 = vld [vmem:[%s4] sm:$0x1]
    %v63 = vperm.slane %v62, 0
    %vm64 = vcmask 261120
    %v66 = vsel %vm64, %v50, 0
    %v69 = vsel %vm64, %v51, 0
    %v72 = vsel %vm64, %v52, 0
    %v75 = vsel %vm64, %v53, 0
    %v78 = vsel %vm64, %v54, 0
    %v81 = vsel %vm64, %v55, 0
    %v84 = vsel %vm64, %v56, 0
    %v87 = vsel %vm64, %v57, 0
    %89 = vmatpush.msra.mxu0 0.0
    %90 = vmatpush.msra.mxu0 0.0
    %91 = vmatpush.msra.mxu0 0.0
    %92 = vmatpush.msra.mxu0 0.0
    %93 = vmatpush.msra.mxu0 0.0
    %94 = vmatpush.msra.mxu0 0.0
    %95 = vmatpush.msra.mxu0 0.0
    %96 = vmatpush.msra.mxu0 0.0
    %97 = vmatpush.msra.mxu0 0.0
    %98 = vmatpush.msra.mxu0 0.0
    %99 = vmatpush.msra.mxu0 0.0
    %100 = vmatpush.msra.mxu0 0.0
    %101 = vmatpush.msra.mxu0 %v61
    %102 = vmatpush.msra.mxu0 %v60
    %103 = vmatpush.msra.mxu0 %v59
    %104 = vmatpush.msra.mxu0 %v58
    %105 = vmatmul.f32.gmra.mxu0 %v66
    %v106 = vpop.f32.mrf.mxu0
    %v107 = vadd.f32 %v63, %v106
    %108 = vmatmul.f32.gmra.mxu0 %v69
    %v109 = vpop.f32.mrf.mxu0
    %v110 = vadd.f32 %v63, %v109
    %111 = vmatmul.f32.gmra.mxu0 %v72
    %v112 = vpop.f32.mrf.mxu0
    %v113 = vadd.f32 %v63, %v112
    %114 = vmatmul.f32.gmra.mxu0 %v75
    %v115 = vpop.f32.mrf.mxu0
    %v116 = vadd.f32 %v63, %v115
    %117 = vmatmul.f32.gmra.mxu0 %v78
    %v118 = vpop.f32.mrf.mxu0
    %v119 = vadd.f32 %v63, %v118
    %120 = vmatmul.f32.gmra.mxu0 %v81
    %v121 = vpop.f32.mrf.mxu0
    %v122 = vadd.f32 %v63, %v121
    %123 = vmatmul.f32.gmra.mxu0 %v84
    %v124 = vpop.f32.mrf.mxu0
    %v125 = vadd.f32 %v63, %v124
    %126 = vmatmul.f32.gmra.mxu0 %v87
    %v127 = vpop.f32.mrf.mxu0
    %v128 = vadd.f32 %v63, %v127
    %129 = vdwg.mxu0
    %v130 = vmax.f32 %v107, 0.0
    %v131 = vmax.f32 %v110, 0.0
    %v132 = vmax.f32 %v113, 0.0
    %v133 = vmax.f32 %v116, 0.0
    %v134 = vmax.f32 %v119, 0.0
    %v135 = vmax.f32 %v122, 0.0
    %v136 = vmax.f32 %v125, 0.0
    %v137 = vmax.f32 %v128, 0.0
    %v138 = vlaneseq
    %v139 = vshrl.u32 %v138, 7
    %v140 = vlaneseq
    %v141 = vand.u32 %v140, 127
    %v142 = vstv %s49
    %vm143 = vcmp.eq.s32.totalorder %v141, %v142
    %v144 = vsel %vm143, 1, 0
    %v145 = vcvt.s32.f32 %v144
    %vm146 = vcmp.eq.s32.totalorder %v139, 0
    %v147 = vsel %vm146, %v145, 0.015625
    %vm148 = vcmask 523264
    %v150 = vsel %vm148, %v147, 0
    %152 = vmatpush.msra.mxu0 0.0
    %153 = vmatpush.msra.mxu0 0.0
    %154 = vmatpush.msra.mxu0 0.0
    %155 = vmatpush.msra.mxu0 0.0
    %156 = vmatpush.msra.mxu0 0.0
    %157 = vmatpush.msra.mxu0 0.0
    %158 = vmatpush.msra.mxu0 0.0
    %159 = vmatpush.msra.mxu0 0.0
    %160 = vmatpush.msra.mxu0 %v137
    %161 = vmatpush.msra.mxu0 %v136
    %162 = vmatpush.msra.mxu0 %v135
    %163 = vmatpush.msra.mxu0 %v134
    %164 = vmatpush.msra.mxu0 %v133
    %165 = vmatpush.msra.mxu0 %v132
    %166 = vmatpush.msra.mxu0 %v131
    %167 = vmatpush.msra.mxu0 %v130
    %168 = vmatmul.f32.gmra.mxu0 %v150
    %v169 = vpop.f32.mrf.mxu0
    %v170 = vadd.f32 0.0, %v169
    %171 = vdwg.mxu0
    %v172 = vld [vmem:[#allocation5] sm:$0xff]
    %v173 = vld [vmem:[#allocation5 + $0x8] sm:$0xff]
    %v174 = vld [vmem:[#allocation5 + $0x10] sm:$0xff]
    %v175 = vld [vmem:[#allocation5 + $0x18] sm:$0xff]
    %v176 = vld [vmem:[#allocation5 + $0x20] sm:$0xff]
    %v177 = vld [vmem:[#allocation5 + $0x28] sm:$0xff]
    %v178 = vld [vmem:[#allocation5 + $0x30] sm:$0xff]
    %v179 = vld [vmem:[#allocation5 + $0x38] sm:$0xff]
    %v180 = vld [vmem:[#allocation5 + $0x40] sm:$0xff]
    %v181 = vld [vmem:[#allocation5 + $0x48] sm:$0xff]
    %v182 = vld [vmem:[#allocation5 + $0x50] sm:$0xff]
    %v183 = vld [vmem:[#allocation5 + $0x58] sm:$0xff]
    %v184 = vld [vmem:[#allocation5 + $0x60] sm:$0xff]
    %v185 = vld [vmem:[#allocation5 + $0x68] sm:$0xff]
    %v186 = vld [vmem:[#allocation5 + $0x70] sm:$0xff]
    %v187 = vld [vmem:[#allocation5 + $0x78] sm:$0xff]
    %s188 = scalar_lea.vmem [#allocation5], 128
    %v189 = vld [vmem:[%s188] sm:$0xff]
    %v190 = vld [vmem:[%s188 + $0x8] sm:$0xff]
    %v191 = vld [vmem:[%s188 + $0x10] sm:$0xff]
    %v192 = vld [vmem:[%s188 + $0x18] sm:$0xff]
    %v193 = vld [vmem:[%s188 + $0x20] sm:$0xff]
    %v194 = vld [vmem:[%s188 + $0x28] sm:$0xff]
    %v195 = vld [vmem:[%s188 + $0x30] sm:$0xff]
    %v196 = vld [vmem:[%s188 + $0x38] sm:$0xff]
    %v197 = vld [vmem:[%s188 + $0x40] sm:$0xff]
    %v198 = vld [vmem:[%s188 + $0x48] sm:$0xff]
    %v199 = vld [vmem:[%s188 + $0x50] sm:$0xff]
    %v200 = vld [vmem:[%s188 + $0x58] sm:$0xff]
    %v201 = vld [vmem:[%s188 + $0x60] sm:$0xff]
    %v202 = vld [vmem:[%s188 + $0x68] sm:$0xff]
    %v203 = vld [vmem:[%s188 + $0x70] sm:$0xff]
    %v204 = vld [vmem:[%s188 + $0x78] sm:$0xff]
    %v206 = vrot.slane %v170, 1
    %208 = vmatpush.msra.mxu0 %v204
    %209 = vmatpush.msra.mxu0 %v203
    %210 = vmatpush.msra.mxu0 %v202
    %211 = vmatpush.msra.mxu0 %v201
    %212 = vmatpush.msra.mxu0 %v200
    %213 = vmatpush.msra.mxu0 %v199
    %214 = vmatpush.msra.mxu0 %v198
    %215 = vmatpush.msra.mxu0 %v197
    %216 = vmatpush.msra.mxu0 %v196
    %217 = vmatpush.msra.mxu0 %v195
    %218 = vmatpush.msra.mxu0 %v194
    %219 = vmatpush.msra.mxu0 %v193
    %220 = vmatpush.msra.mxu0 %v192
    %221 = vmatpush.msra.mxu0 %v191
    %222 = vmatpush.msra.mxu0 %v190
    %223 = vmatpush.msra.mxu0 %v189
    %224 = vmatmul.f32.gmra.mxu0 %v206
    %v225 = vpop.f32.mrf.mxu0
    %v226 = vadd.f32 0.0, %v225
    %227 = vdwg.mxu0
    %228 = vmatpush.msra.mxu0 %v187
    %229 = vmatpush.msra.mxu0 %v186
    %230 = vmatpush.msra.mxu0 %v185
    %231 = vmatpush.msra.mxu0 %v184
    %232 = vmatpush.msra.mxu0 %v183
    %233 = vmatpush.msra.mxu0 %v182
    %234 = vmatpush.msra.mxu0 %v181
    %235 = vmatpush.msra.mxu0 %v180
    %236 = vmatpush.msra.mxu0 %v179
    %237 = vmatpush.msra.mxu0 %v178
    %238 = vmatpush.msra.mxu0 %v177
    %239 = vmatpush.msra.mxu0 %v176
    %240 = vmatpush.msra.mxu0 %v175
    %241 = vmatpush.msra.mxu0 %v174
    %242 = vmatpush.msra.mxu0 %v173
    %243 = vmatpush.msra.mxu0 %v172
    %244 = vmatmul.f32.gmra.mxu0 %v170
    %v245 = vpop.f32.mrf.mxu0
    %v246 = vadd.f32 %v226, %v245
    %247 = vdwg.mxu0
    %v248 = vld [vmem:[%s4 + $0x1] sm:$0x1]
    %v249 = vadd.f32 %v246, %v248
    %s250 = scalar_lea.vmem [#allocation5], 256
    %v251 = vld [vmem:[%s250] sm:$0xff]
    %v252 = vld [vmem:[%s250 + $0x8] sm:$0xff]
    %v253 = vld [vmem:[%s250 + $0x10] sm:$0xff]
    %v254 = vld [vmem:[%s250 + $0x18] sm:$0xff]
    %v255 = vld [vmem:[%s250 + $0x20] sm:$0xff]
    %v256 = vld [vmem:[%s250 + $0x28] sm:$0xff]
    %v257 = vld [vmem:[%s250 + $0x30] sm:$0xff]
    %v258 = vld [vmem:[%s250 + $0x38] sm:$0xff]
    %v259 = vld [vmem:[%s250 + $0x40] sm:$0xff]
    %v260 = vld [vmem:[%s250 + $0x48] sm:$0xff]
    %v261 = vld [vmem:[%s250 + $0x50] sm:$0xff]
    %v262 = vld [vmem:[%s250 + $0x58] sm:$0xff]
    %v263 = vld [vmem:[%s250 + $0x60] sm:$0xff]
    %v264 = vld [vmem:[%s250 + $0x68] sm:$0xff]
    %v265 = vld [vmem:[%s250 + $0x70] sm:$0xff]
    %v266 = vld [vmem:[%s250 + $0x78] sm:$0xff]
    %v267 = vld [vmem:[%s4 + $0x2] sm:$0x1]
    %v268 = vperm.slane %v267, 0
    %269 = vmatpush.msra.mxu0 %v266
    %270 = vmatpush.msra.mxu0 %v265
    %271 = vmatpush.msra.mxu0 %v264
    %272 = vmatpush.msra.mxu0 %v263
    %273 = vmatpush.msra.mxu0 %v262
    %274 = vmatpush.msra.mxu0 %v261
    %275 = vmatpush.msra.mxu0 %v260
    %276 = vmatpush.msra.mxu0 %v259
    %277 = vmatpush.msra.mxu0 %v258
    %278 = vmatpush.msra.mxu0 %v257
    %279 = vmatpush.msra.mxu0 %v256
    %280 = vmatpush.msra.mxu0 %v255
    %281 = vmatpush.msra.mxu0 %v254
    %282 = vmatpush.msra.mxu0 %v253
    %283 = vmatpush.msra.mxu0 %v252
    %284 = vmatpush.msra.mxu0 %v251
    %285 = vmatmul.f32.gmra.mxu0 %v130
    %v286 = vpop.f32.mrf.mxu0
    %v287 = vadd.f32 %v268, %v286
    %288 = vmatmul.f32.gmra.mxu0 %v131
    %v289 = vpop.f32.mrf.mxu0
    %v290 = vadd.f32 %v268, %v289
    %291 = vmatmul.f32.gmra.mxu0 %v132
    %v292 = vpop.f32.mrf.mxu0
    %v293 = vadd.f32 %v268, %v292
    %294 = vmatmul.f32.gmra.mxu0 %v133
    %v295 = vpop.f32.mrf.mxu0
    %v296 = vadd.f32 %v268, %v295
    %297 = vmatmul.f32.gmra.mxu0 %v134
    %v298 = vpop.f32.mrf.mxu0
    %v299 = vadd.f32 %v268, %v298
    %300 = vmatmul.f32.gmra.mxu0 %v135
    %v301 = vpop.f32.mrf.mxu0
    %v302 = vadd.f32 %v268, %v301
    %303 = vmatmul.f32.gmra.mxu0 %v136
    %v304 = vpop.f32.mrf.mxu0
    %v305 = vadd.f32 %v268, %v304
    %306 = vmatmul.f32.gmra.mxu0 %v137
    %v307 = vpop.f32.mrf.mxu0
    %v308 = vadd.f32 %v268, %v307
    %309 = vdwg.mxu0
    %310 = vmatpush.xpose.msra.mxu0 0.0
    %311 = vmatpush.xpose.msra.mxu0 0.0
    %312 = vmatpush.xpose.msra.mxu0 0.0
    %313 = vmatpush.xpose.msra.mxu0 0.0
    %314 = vmatpush.xpose.msra.mxu0 0.0
    %315 = vmatpush.xpose.msra.mxu0 0.0
    %316 = vmatpush.xpose.msra.mxu0 0.0
    %317 = vmatpush.xpose.msra.mxu0 0.0
    %318 = vmatpush.xpose.msra.mxu0 %v308
    %319 = vmatpush.xpose.msra.mxu0 %v305
    %320 = vmatpush.xpose.msra.mxu0 %v302
    %321 = vmatpush.xpose.msra.mxu0 %v299
    %322 = vmatpush.xpose.msra.mxu0 %v296
    %323 = vmatpush.xpose.msra.mxu0 %v293
    %324 = vmatpush.xpose.msra.mxu0 %v290
    %325 = vmatpush.xpose.msra.mxu0 %v287
    %326 = vmatmul.f32.gmra.mxu0 %v249
    %v327 = vpop.f32.mrf.mxu0
    %v328 = vadd.f32 0.0, %v327
    %329 = vdwg.mxu0
    %v330 = vmul.f32 %v328, 0.125
    %vm331 = vcmask 516096
    %v332 = vsel %vm331, %v330, -inf
    %333 = vmax.xlane.f32.xlu0 %v332
    %v334 = vpop.xlane.xlu0 %333
    %v335 = vsub.f32 %v330, %v334
    %v336 = vmul.f32 %v335, 1.442695
    %v337 = vpow.pop %v336
    %v338 = vsel %vm331, %v337, 0.0
    %339 = vadd.xlane.f32.xlu0 %v338
    %v340 = vpop.xlane.xlu0 %339
    %v341 = vrcp.pop %v340
    %v342 = vmul.f32 %v340, %v341
    %v343 = vsub.f32 1.0, %v342
    %v344 = vmul.f32 %v341, %v343
    %v345 = vadd.f32 %v341, %v344
    %vm346 = vweird.f32 %v340
    %vm347 = vweird.f32 %v341
    %vm348 = vmor %vm346, %vm347
    %v349 = vsel %vm348, %v341, %v345
    %v350 = vand.u32 2147483647, %v340
    %vm351 = vcmp.eq.f32.partialorder %v350, 8.507059e+37
    %v352 = vand.u32 %v340, 2147483648
    %v353 = vor.u32 1.1754944e-38, %v352
    %v354 = vsel %vm351, %v353, %v349
    %v355 = vmul.f32 %v337, %v354
    %v357 = vsel %vm148, %v355, 0
    %359 = vmatpush.msra.mxu0 0.0
    %360 = vmatpush.msra.mxu0 0.0
    %361 = vmatpush.msra.mxu0 0.0
    %362 = vmatpush.msra.mxu0 0.0
    %363 = vmatpush.msra.mxu0 0.0
    %364 = vmatpush.msra.mxu0 0.0
    %365 = vmatpush.msra.mxu0 0.0
    %366 = vmatpush.msra.mxu0 0.0
    %367 = vmatpush.msra.mxu0 %v308
    %368 = vmatpush.msra.mxu0 %v305
    %369 = vmatpush.msra.mxu0 %v302
    %370 = vmatpush.msra.mxu0 %v299
    %371 = vmatpush.msra.mxu0 %v296
    %372 = vmatpush.msra.mxu0 %v293
    %373 = vmatpush.msra.mxu0 %v290
    %374 = vmatpush.msra.mxu0 %v287
    %375 = vmatmul.f32.gmra.mxu0 %v357
    %v376 = vpop.f32.mrf.mxu0
    %v377 = vadd.f32 0.0, %v376
    %378 = vdwg.mxu0
    %s379 = scalar_lea.vmem [#allocation5], 384
    %v380 = vld [vmem:[%s379] sm:$0xff]
    %v381 = vld [vmem:[%s379 + $0x8] sm:$0xff]
    %v382 = vld [vmem:[%s379 + $0x10] sm:$0xff]
    %v383 = vld [vmem:[%s379 + $0x18] sm:$0xff]
    %v384 = vld [vmem:[%s379 + $0x20] sm:$0xff]
    %v385 = vld [vmem:[%s379 + $0x28] sm:$0xff]
    %v386 = vld [vmem:[%s379 + $0x30] sm:$0xff]
    %v387 = vld [vmem:[%s379 + $0x38] sm:$0xff]
    %v388 = vld [vmem:[%s379 + $0x40] sm:$0xff]
    %v389 = vld [vmem:[%s379 + $0x48] sm:$0xff]
    %v390 = vld [vmem:[%s379 + $0x50] sm:$0xff]
    %v391 = vld [vmem:[%s379 + $0x58] sm:$0xff]
    %v392 = vld [vmem:[%s379 + $0x60] sm:$0xff]
    %v393 = vld [vmem:[%s379 + $0x68] sm:$0xff]
    %v394 = vld [vmem:[%s379 + $0x70] sm:$0xff]
    %v395 = vld [vmem:[%s379 + $0x78] sm:$0xff]
    %v396 = vld [vmem:[%s4 + $0x3] sm:$0x1]
    %397 = vmatpush.msra.mxu0 %v395
    %398 = vmatpush.msra.mxu0 %v394
    %399 = vmatpush.msra.mxu0 %v393
    %400 = vmatpush.msra.mxu0 %v392
    %401 = vmatpush.msra.mxu0 %v391
    %402 = vmatpush.msra.mxu0 %v390
    %403 = vmatpush.msra.mxu0 %v389
    %404 = vmatpush.msra.mxu0 %v388
    %405 = vmatpush.msra.mxu0 %v387
    %406 = vmatpush.msra.mxu0 %v386
    %407 = vmatpush.msra.mxu0 %v385
    %408 = vmatpush.msra.mxu0 %v384
    %409 = vmatpush.msra.mxu0 %v383
    %410 = vmatpush.msra.mxu0 %v382
    %411 = vmatpush.msra.mxu0 %v381
    %412 = vmatpush.msra.mxu0 %v380
    %413 = vmatmul.f32.gmra.mxu0 %v377
    %v414 = vpop.f32.mrf.mxu0
    %v415 = vadd.f32 %v396, %v414
    %416 = vdwg.mxu0
    %vm417 = vcmask 1040384
    %v418 = vsel %vm417, %v415, -inf
    %419 = vmax.xlane.f32.xlu0 %v418
    %v420 = vpop.xlane.xlu0 %419
    %v421 = vsub.f32 %v415, %v420
    %v422 = vmul.f32 %v421, 1.442695
    %v423 = vpow.pop %v422
    %v424 = vsel %vm417, %v423, 0.0
    %425 = vadd.xlane.f32.xlu0 %v424
    %v426 = vpop.xlane.xlu0 %425
    %v427 = vrcp.pop %v426
    %v428 = vmul.f32 %v426, %v427
    %v429 = vsub.f32 1.0, %v428
    %v430 = vmul.f32 %v427, %v429
    %v431 = vadd.f32 %v427, %v430
    %vm432 = vweird.f32 %v426
    %vm433 = vweird.f32 %v427
    %vm434 = vmor %vm432, %vm433
    %v435 = vsel %vm434, %v427, %v431
    %v436 = vand.u32 2147483647, %v426
    %vm437 = vcmp.eq.f32.partialorder %v436, 8.507059e+37
    %v438 = vand.u32 %v426, 2147483648
    %v439 = vor.u32 1.1754944e-38, %v438
    %v440 = vsel %vm437, %v439, %v435
    %v441 = vmul.f32 %v423, %v440
    %442 = vst [vmem:[%s5] sm:$0x1] %v441
    // Predicated region
    $region30: #{type_net_forward.1} parent=1 // pred_check
      _
    $region31: #{type_net_forward.1} parent=1 // pred_check_branch
      %444 = sbr.rel (0) target = $region33
    $region32: #{type_net_forward.1} parent=1 // pred_region
      _
    $region33: #{type_net_forward.1} parent=1 // pred_fallthru
      _
    // Predicated region
    $region34: #{type_net_forward.1} parent=1 // pred_check
      _
    $region35: #{type_net_forward.1} parent=1 // pred_check_branch
      %446 = sbr.rel (0) target = $region37
    $region36: #{type_net_forward.1} parent=1 // pred_region
      _
    $region37: #{type_net_forward.1} parent=1 // pred_fallthru
      _
    %447 = vsyncpa [#allocation3], 1
    %448 = vsyncpa [#allocation4], 1

</llo_original>
